<compile_context>
chip_gen: v5e
topology: v5e:2x2
jax: 0.10.0
libtpu: 0.0.40
codegen_flags: <defaults>
</compile_context>

<pallas_src>
import jax
import jax.numpy as jnp
from jax import lax
from jax.experimental import pallas as pl
from jax.experimental.pallas import tpu as pltpu

_EPS = 1e-4  # the +0.0001 in the PyTorch normalization denominator


def _loss_tile_kernel(lo_ref, hi_ref, acc_ref, prev_ref):
    """One (tile_h, W) row-tile of one batch element.

    Accumulates per-column partial reductions into the per-batch resident
    (16, W) output block:
      rows 0..7  (sums):  gx_lo^2, gx_hi^2, gx_lo*gx_hi,
                          gy_lo^2, gy_hi^2, gy_lo*gy_hi, (lo-hi)^2, pad
      rows 8..15 (maxes): max gx_lo, max gx_hi, max gy_lo, max gy_hi, pad x4
    gx/gy are the *unnormalized* |2x2-conv gradient| maps of the PyTorch
    module, re-indexed to align with the un-padded input tile.
    """
    h = pl.program_id(1)
    last = pl.num_programs(1) - 1
    tile_h, W = lo_ref.shape

    # Cast in-kernel: bf16/f16 inputs stream at native width (no wrapper-side
    # f32 copy pass, half the HBM bytes for 16-bit maps).
    lo = lo_ref[...].astype(jnp.float32)
    hi = hi_ref[...].astype(jnp.float32)

    # (1, W) lane mask: 0.0 in lane 0, 1.0 elsewhere.  Applied to the tiny
    # y-gradient *partials* (re-indexed column 0 maps to no conv output).
    lane = lax.broadcasted_iota(jnp.int32, (1, W), 1)
    colmask = (lane >= 1).astype(jnp.float32)

    # --- first tile of this batch element: make the stale carry harmless ----
    # prev := row 0  =>  grad_y row 0 == |t0 - t0| == 0 exactly, which is the
    # correct "no contribution" value, so interior tiles need no row mask.
    @pl.when(h == 0)
    def _():
        prev_ref[0:1, :] = lo[0:1, :]
        prev_ref[1:2, :] = hi[0:1, :]

    prev_lo = prev_ref[0:1, :]
    prev_hi = prev_ref[1:2, :]

    zcol = jnp.zeros((tile_h, 1), jnp.float32)

    # x gradient re-indexed to input rows: gx[r, c] = |t[r, c+1] - t[r, c]|,
    # where column W is the PyTorch-appended zero column.  The value stored at
    # input row r is conv output row r-1 (row 0 is invalid -> corrected below).
    def grad_x(t):
        nxt = jnp.concatenate([t[:, 1:], zcol], axis=1) if W > 1 else zcol
        return jnp.abs(nxt - t)

    # y gradient re-indexed to (input row, input col):
    # gy[r, c] = |t[r, c] - t[r-1, c]| (row -1 = carried last row of the
    # previous tile).  Value at (r, c) is conv output (r-1, c-1); column 0 is
    # excluded at the partial level.
    def grad_y(t, prev_row):
        above = (jnp.concatenate([prev_row, t[: tile_h - 1, :]], axis=0)
                 if tile_h > 1 else prev_row)
        return jnp.abs(t - above)

    gx_lo = grad_x(lo)
    gx_hi = grad_x(hi)
    gy_lo = grad_y(lo, prev_lo)
    gy_hi = grad_y(hi, prev_hi)
    diff = lo - hi

    def rsum(v):
        return jnp.sum(v, axis=0, keepdims=True)   # (1, W)

    def rmax(v):
        return jnp.max(v, axis=0, keepdims=True)   # (1, W)

    zrow = jnp.zeros((1, W), jnp.float32)
    psums = jnp.concatenate(
        [rsum(gx_lo * gx_lo),
         rsum(gx_hi * gx_hi),
         rsum(gx_lo * gx_hi),
         rsum(gy_lo * gy_lo) * colmask,
         rsum(gy_hi * gy_hi) * colmask,
         rsum(gy_lo * gy_hi) * colmask,
         rsum(diff * diff),
         zrow],
        axis=0)                                    # (8, W), sublane aligned
    pmaxs = jnp.concatenate(
        [rmax(gx_lo),
         rmax(gx_hi),
         rmax(gy_lo) * colmask,
         rmax(gy_hi) * colmask,
         zrow, zrow, zrow, zrow],
        axis=0)                                    # (8, W), sublane aligned

    @pl.when(h == 0)
    def _():
        acc_ref[0:8, :] = psums
        acc_ref[8:16, :] = pmaxs

    @pl.when(h > 0)
    def _():
        acc_ref[0:8, :] = acc_ref[0:8, :] + psums
        acc_ref[8:16, :] = jnp.maximum(acc_ref[8:16, :], pmaxs)

    # --- first-tile correction (once per batch element) ---------------------
    # The x-gradient computed at global image row 0 corresponds to no conv
    # output: subtract it from the sums and recompute the maxes without it.
    @pl.when(h == 0)
    def _():
        r0_lo = gx_lo[0:1, :]
        r0_hi = gx_hi[0:1, :]
        acc_ref[0:1, :] = acc_ref[0:1, :] - r0_lo * r0_lo
        acc_ref[1:2, :] = acc_ref[1:2, :] - r0_hi * r0_hi
        acc_ref[2:3, :] = acc_ref[2:3, :] - r0_lo * r0_hi
        rows = lax.broadcasted_iota(jnp.int32, (tile_h, W), 0)
        keep = rows >= 1                 # gradients are >= 0: 0-fill is safe for max
        acc_ref[8:9, :] = rmax(jnp.where(keep, gx_lo, 0.0))
        acc_ref[9:10, :] = rmax(jnp.where(keep, gx_hi, 0.0))

    # --- last tile: contribution of the appended zero row -------------------
    # Conv output row H-1 in the y direction is |t[H-1, c+1]|; add it from this
    # tile's last row (H % tile_h == 0, so local row tile_h-1 is global H-1).
    @pl.when(h == last)
    def _():
        gl_lo = jnp.abs(lo[tile_h - 1: tile_h, :]) * colmask
        gl_hi = jnp.abs(hi[tile_h - 1: tile_h, :]) * colmask
        acc_ref[3:4, :] = acc_ref[3:4, :] + gl_lo * gl_lo
        acc_ref[4:5, :] = acc_ref[4:5, :] + gl_hi * gl_hi
        acc_ref[5:6, :] = acc_ref[5:6, :] + gl_lo * gl_hi
        acc_ref[10:11, :] = jnp.maximum(acc_ref[10:11, :], gl_lo)
        acc_ref[11:12, :] = jnp.maximum(acc_ref[11:12, :], gl_hi)

    # Carry this tile's last rows for the next row-tile's y gradient.  Valid
    # only because the row-tile axis is the innermost, sequential ("arbitrary")
    # grid axis and only the batch axis is "parallel": all row-tiles of a batch
    # element run in order on the same core.  Do not reorder the grid.
    prev_ref[0:1, :] = lo[tile_h - 1: tile_h, :]
    prev_ref[1:2, :] = hi[tile_h - 1: tile_h, :]


def _pick_tile_h(H, W, itemsize, budget_bytes=2 << 20):
    """Largest sublane-aligned divisor of H whose block fits ~2 MiB.

    2 MiB per input block -> double-buffered pipelined input footprint ~8 MiB,
    comfortably inside v5e's 16 MiB / v6e-v7x's 32 MiB default scoped VMEM,
    while being large enough (>=256-512 rows at typical widths) to approach the
    HBM roofline and amortize the ~0.35 us per-grid-step overhead.
    """
    best = None
    for th in range(8, H + 1, 8):
        if H % th == 0 and th * W * itemsize <= budget_bytes:
            best = th
    if best is not None:
        return best
    for th in range(H, 0, -1):          # odd heights: any divisor in budget
        if H % th == 0 and th * W * itemsize <= budget_bytes:
            return th
    # TODO(synk): ragged last row-tile (grid = cdiv(H, th)) so huge heights
    # with no in-budget divisor don't collapse to a whole-image block.
    return H


def _vmem_limit_bytes(th, W, itemsize):
    lanes = max(128, ((W + 127) // 128) * 128)
    rows = ((th + 7) // 8) * 8
    in_block = rows * lanes * itemsize
    out_block = 16 * lanes * 4
    scratch = 8 * lanes * 4
    # 2 inputs x 2 pipeline buffers + 2 output buffers + scratch + margin for
    # Mosaic-internal scratch.
    needed = 4 * in_block + 2 * out_block + scratch + (4 << 20)
    return int(min(max(needed, 16 << 20), 48 << 20))


def kind_loss_illumina(output_i, input_high_i, *, tile_h=None):
    """output_i, input_high_i: NCHW arrays with C == 1 (illumination maps)."""
    N, C, H, W = output_i.shape
    assert C == 1, "illumination loss expects a single channel"
    assert input_high_i.shape == output_i.shape
    # No dtype cast here: stream the native dtype, cast inside the kernel.
    lo = output_i.reshape(N, H, W)
    hi = input_high_i.reshape(N, H, W)
    itemsize = jnp.dtype(lo.dtype).itemsize

    th = _pick_tile_h(H, W, itemsize) if tile_h is None else tile_h
    assert H % th == 0, "tile_h must divide H"
    n_row_tiles = H // th

    acc = pl.pallas_call(
        _loss_tile_kernel,
        grid=(N, n_row_tiles),
        in_specs=[
            pl.BlockSpec((None, th, W), lambda n, h: (n, h, 0)),
            pl.BlockSpec((None, th, W), lambda n, h: (n, h, 0)),
        ],
        out_specs=pl.BlockSpec((None, 16, W), lambda n, h: (n, 0, 0)),
        out_shape=jax.ShapeDtypeStruct((N, 16, W), jnp.float32),
        scratch_shapes=[pltpu.VMEM((2, W), jnp.float32)],
        compiler_params=pltpu.CompilerParams(
            dimension_semantics=("parallel", "arbitrary"),
            vmem_limit_bytes=_vmem_limit_bytes(th, W, itemsize),
        ),
    )(lo, hi)

    # ---- tiny epilogue (exact algebraic form of the loss) ------------------
    # grad_min is exactly 0 for every gradient map (the appended zero row /
    # column always produces |0-0| = 0 entries and all entries are absolute
    # values), so (g - min)/(max - min + 1e-4) == g / (max + 1e-4).
    sums = acc[:, 0:7, :]                               # (N, 7, W)
    maxs = jnp.max(acc[:, 8:12, :], axis=(0, 2))        # (4,) global maxes
    cx_lo = 1.0 / (maxs[0] + _EPS)
    cx_hi = 1.0 / (maxs[1] + _EPS)
    cy_lo = 1.0 / (maxs[2] + _EPS)
    cy_hi = 1.0 / (maxs[3] + _EPS)

    # Combine per (batch, column) BEFORE the global sum so the cancelling
    # operands of  ca^2*Saa + cb^2*Sbb - 2*ca*cb*Sab  are column-sized (better
    # conditioned when the two normalized gradients are close).
    x_col = ((cx_lo * cx_lo) * sums[:, 0, :] + (cx_hi * cx_hi) * sums[:, 1, :]
             - (2.0 * cx_lo * cx_hi) * sums[:, 2, :])   # (N, W)
    y_col = ((cy_lo * cy_lo) * sums[:, 3, :] + (cy_hi * cy_hi) * sums[:, 4, :]
             - (2.0 * cy_lo * cy_hi) * sums[:, 5, :])   # (N, W)

    n_elems = float(N * H * W)
    loss_grad = (jnp.sum(x_col) + jnp.sum(y_col)) / n_elems
    loss_square = jnp.sum(sums[:, 6, :]) / n_elems
    return loss_square + loss_grad


def _reference(output_i, input_high_i):
    """Pure-JAX mirror of the PyTorch module, for verification."""
    def gradient(t, direction):
        t = jnp.pad(t, ((0, 0), (0, 0), (0, 1), (0, 1)))
        if direction == "x":
            g = jnp.abs(t[:, :, 1:, 1:] - t[:, :, 1:, :-1])
        else:
            g = jnp.abs(t[:, :, 1:, 1:] - t[:, :, :-1, 1:])
        return (g - g.min()) / (g.max() - g.min() + 0.0001)

    x_loss = jnp.square(gradient(output_i, "x") - gradient(input_high_i, "x"))
    y_loss = jnp.square(gradient(output_i, "y") - gradient(input_high_i, "y"))
    loss_grad = jnp.mean(x_loss + y_loss)
    loss_square = jnp.mean(jnp.square(output_i - input_high_i))
    return loss_square + loss_grad


if __name__ == "__main__":
    key = jax.random.PRNGKey(0)
    k1, k2, k3, k4 = jax.random.split(key, 4)

    # illumination maps: N=2, C=1, H=W=16
    output_i = jax.random.uniform(k1, (2, 1, 16, 16), dtype=jnp.float32)
    input_high_i = jax.random.uniform(k2, (2, 1, 16, 16), dtype=jnp.float32)
    ref = jax.block_until_ready(_reference(output_i, input_high_i))

    # default tiling (single row-tile at this size)
    loss = jax.block_until_ready(kind_loss_illumina(output_i, input_high_i))
    assert jnp.allclose(loss, ref, rtol=1e-4, atol=1e-6), (loss, ref)

    # force multiple row-tiles to exercise the cross-tile boundary carry
    loss_t = jax.block_until_ready(
        kind_loss_illumina(output_i, input_high_i, tile_h=8))
    assert jnp.allclose(loss_t, ref, rtol=1e-4, atol=1e-6), (loss_t, ref)

    # asymmetric H != W case, multi-tile
    a = jax.random.uniform(k3, (2, 1, 24, 16), dtype=jnp.float32)
    b = jax.random.uniform(k4, (2, 1, 24, 16), dtype=jnp.float32)
    ref2 = jax.block_until_ready(_reference(a, b))
    loss2 = jax.block_until_ready(kind_loss_illumina(a, b, tile_h=8))
    assert jnp.allclose(loss2, ref2, rtol=1e-4, atol=1e-6), (loss2, ref2)

    # native-dtype streaming path: bf16 inputs, f32 math inside the kernel
    a16 = a.astype(jnp.bfloat16)
    b16 = b.astype(jnp.bfloat16)
    ref3 = jax.block_until_ready(
        _reference(a16.astype(jnp.float32), b16.astype(jnp.float32)))
    loss3 = jax.block_until_ready(kind_loss_illumina(a16, b16))
    assert jnp.allclose(loss3, ref3, rtol=1e-4, atol=1e-6), (loss3, ref3)

    print("KERNEL_OK")
</pallas_src>

<mosaic_0001>
module attributes {stable_mosaic.version = 11 : i64} {
  func.func @_loss_tile_kernel(%arg0: i32, %arg1: i32, %arg2: memref<1x16x16xf32, #tpu.memory_space<vmem>>, %arg3: memref<1x16x16xf32, #tpu.memory_space<vmem>>, %arg4: memref<1x16x16xf32, #tpu.memory_space<vmem>>, %arg5: memref<2x16xf32, #tpu.memory_space<vmem>>) attributes {dimension_semantics = [#tpu.dimension_semantics<parallel>, #tpu.dimension_semantics<arbitrary>], iteration_bounds = array<i64: 2, 1>, scalar_prefetch = 0 : i64, scratch_operands = 1 : i64, tpu.core_type = #tpu.core_type<tc>, window_params = [{transform_indices = @transform_0, window_bounds = array<i64: 1, 16, 16>}, {transform_indices = @transform_1, window_bounds = array<i64: 1, 16, 16>}, {transform_indices = @transform_2, window_bounds = array<i64: 1, 16, 16>}]} {
    %c0 = arith.constant 0 : index
    %c0_0 = arith.constant 0 : index
    %c0_1 = arith.constant 0 : index
    %0 = vector.load %arg2[%c0, %c0_0, %c0_1] : memref<1x16x16xf32, #tpu.memory_space<vmem>>, vector<1x16x16xf32>
    %1 = vector.shape_cast %0 : vector<1x16x16xf32> to vector<16x16xf32>
    %c0_2 = arith.constant 0 : index
    %c0_3 = arith.constant 0 : index
    %c0_4 = arith.constant 0 : index
    %2 = vector.load %arg3[%c0_2, %c0_3, %c0_4] : memref<1x16x16xf32, #tpu.memory_space<vmem>>, vector<1x16x16xf32>
    %3 = vector.shape_cast %2 : vector<1x16x16xf32> to vector<16x16xf32>
    %4 = tpu.iota {dimensions = array<i32: 1>} : vector<1x16xi32>
    %c1_i32 = arith.constant 1 : i32
    %5 = vector.broadcast %c1_i32 : i32 to vector<1x16xi32>
    %6 = arith.cmpi sge, %4, %5 : vector<1x16xi32>
    %7 = arith.extui %6 : vector<1x16xi1> to vector<1x16xi32>
    %8 = arith.sitofp %7 : vector<1x16xi32> to vector<1x16xf32>
    %c0_i32 = arith.constant 0 : i32
    %9 = arith.cmpi eq, %arg1, %c0_i32 : i32
    %10 = arith.extui %9 : i1 to i32
    %c0_i32_5 = arith.constant 0 : i32
    %11 = arith.cmpi ne, %10, %c0_i32_5 : i32
    scf.if %11 {
      %85 = vector.extract_strided_slice %1 {offsets = [0, 0], sizes = [1, 16], strides = [1, 1]} : vector<16x16xf32> to vector<1x16xf32>
      %c0_33 = arith.constant 0 : index
      %c0_34 = arith.constant 0 : index
      %86 = vector.load %arg5[%c0_33, %c0_34] : memref<2x16xf32, #tpu.memory_space<vmem>>, vector<1x16xf32>
      tpu.vector_store %arg5[%c0_33, %c0_34], %85 {strides = array<i32>} : memref<2x16xf32, #tpu.memory_space<vmem>>, vector<1x16xf32>,
      %87 = vector.extract_strided_slice %3 {offsets = [0, 0], sizes = [1, 16], strides = [1, 1]} : vector<16x16xf32> to vector<1x16xf32>
      %c1_35 = arith.constant 1 : index
      %c0_36 = arith.constant 0 : index
      %88 = vector.load %arg5[%c1_35, %c0_36] : memref<2x16xf32, #tpu.memory_space<vmem>>, vector<1x16xf32>
      tpu.vector_store %arg5[%c1_35, %c0_36], %87 {strides = array<i32>} : memref<2x16xf32, #tpu.memory_space<vmem>>, vector<1x16xf32>,
    } else {
    }
    %c0_6 = arith.constant 0 : index
    %c0_7 = arith.constant 0 : index
    %12 = vector.load %arg5[%c0_6, %c0_7] : memref<2x16xf32, #tpu.memory_space<vmem>>, vector<1x16xf32>
    %c1 = arith.constant 1 : index
    %c0_8 = arith.constant 0 : index
    %13 = vector.load %arg5[%c1, %c0_8] : memref<2x16xf32, #tpu.memory_space<vmem>>, vector<1x16xf32>
    %cst = arith.constant 0.000000e+00 : f32
    %14 = vector.broadcast %cst : f32 to vector<16x1xf32>
    %15 = vector.extract_strided_slice %1 {offsets = [0, 1], sizes = [16, 15], strides = [1, 1]} : vector<16x16xf32> to vector<16x15xf32>
    %16 = tpu.concatenate %15, %14 in 1 : vector<16x15xf32>, vector<16x1xf32> -> vector<16x16xf32>
    %17 = arith.subf %16, %1 : vector<16x16xf32>
    %18 = math.absf %17 : vector<16x16xf32>
    %19 = vector.extract_strided_slice %3 {offsets = [0, 1], sizes = [16, 15], strides = [1, 1]} : vector<16x16xf32> to vector<16x15xf32>
    %20 = tpu.concatenate %19, %14 in 1 : vector<16x15xf32>, vector<16x1xf32> -> vector<16x16xf32>
    %21 = arith.subf %20, %3 : vector<16x16xf32>
    %22 = math.absf %21 : vector<16x16xf32>
    %23 = vector.extract_strided_slice %1 {offsets = [0, 0], sizes = [15, 16], strides = [1, 1]} : vector<16x16xf32> to vector<15x16xf32>
    %24 = tpu.concatenate %12, %23 in 0 : vector<1x16xf32>, vector<15x16xf32> -> vector<16x16xf32>
    %25 = arith.subf %1, %24 : vector<16x16xf32>
    %26 = math.absf %25 : vector<16x16xf32>
    %27 = vector.extract_strided_slice %3 {offsets = [0, 0], sizes = [15, 16], strides = [1, 1]} : vector<16x16xf32> to vector<15x16xf32>
    %28 = tpu.concatenate %13, %27 in 0 : vector<1x16xf32>, vector<15x16xf32> -> vector<16x16xf32>
    %29 = arith.subf %3, %28 : vector<16x16xf32>
    %30 = math.absf %29 : vector<16x16xf32>
    %31 = arith.subf %1, %3 : vector<16x16xf32>
    %cst_9 = arith.constant 0.000000e+00 : f32
    %32 = vector.broadcast %cst_9 : f32 to vector<1x16xf32>
    %33 = arith.mulf %18, %18 : vector<16x16xf32>
    %cst_10 = arith.constant dense<0.000000e+00> : vector<16xf32>
    %34 = vector.multi_reduction <add>, %33, %cst_10 [0] : vector<16x16xf32> to vector<16xf32>
    %35 = vector.shape_cast %34 : vector<16xf32> to vector<1x16xf32>
    %36 = arith.mulf %22, %22 : vector<16x16xf32>
    %cst_11 = arith.constant dense<0.000000e+00> : vector<16xf32>
    %37 = vector.multi_reduction <add>, %36, %cst_11 [0] : vector<16x16xf32> to vector<16xf32>
    %38 = vector.shape_cast %37 : vector<16xf32> to vector<1x16xf32>
    %39 = arith.mulf %18, %22 : vector<16x16xf32>
    %cst_12 = arith.constant dense<0.000000e+00> : vector<16xf32>
    %40 = vector.multi_reduction <add>, %39, %cst_12 [0] : vector<16x16xf32> to vector<16xf32>
    %41 = vector.shape_cast %40 : vector<16xf32> to vector<1x16xf32>
    %42 = arith.mulf %26, %26 : vector<16x16xf32>
    %cst_13 = arith.constant dense<0.000000e+00> : vector<16xf32>
    %43 = vector.multi_reduction <add>, %42, %cst_13 [0] : vector<16x16xf32> to vector<16xf32>
    %44 = vector.shape_cast %43 : vector<16xf32> to vector<1x16xf32>
    %45 = arith.mulf %44, %8 : vector<1x16xf32>
    %46 = arith.mulf %30, %30 : vector<16x16xf32>
    %cst_14 = arith.constant dense<0.000000e+00> : vector<16xf32>
    %47 = vector.multi_reduction <add>, %46, %cst_14 [0] : vector<16x16xf32> to vector<16xf32>
    %48 = vector.shape_cast %47 : vector<16xf32> to vector<1x16xf32>
    %49 = arith.mulf %48, %8 : vector<1x16xf32>
    %50 = arith.mulf %26, %30 : vector<16x16xf32>
    %cst_15 = arith.constant dense<0.000000e+00> : vector<16xf32>
    %51 = vector.multi_reduction <add>, %50, %cst_15 [0] : vector<16x16xf32> to vector<16xf32>
    %52 = vector.shape_cast %51 : vector<16xf32> to vector<1x16xf32>
    %53 = arith.mulf %52, %8 : vector<1x16xf32>
    %54 = arith.mulf %31, %31 : vector<16x16xf32>
    %cst_16 = arith.constant dense<0.000000e+00> : vector<16xf32>
    %55 = vector.multi_reduction <add>, %54, %cst_16 [0] : vector<16x16xf32> to vector<16xf32>
    %56 = vector.shape_cast %55 : vector<16xf32> to vector<1x16xf32>
    %57 = tpu.concatenate %35, %38, %41, %45, %49, %53, %56, %32 in 0 : vector<1x16xf32>, vector<1x16xf32>, vector<1x16xf32>, vector<1x16xf32>, vector<1x16xf32>, vector<1x16xf32>, vector<1x16xf32>, vector<1x16xf32> -> vector<8x16xf32>
    %cst_17 = arith.constant dense<0xFF800000> : vector<16xf32>
    %58 = vector.multi_reduction <maximumf>, %18, %cst_17 [0] : vector<16x16xf32> to vector<16xf32>
    %59 = vector.shape_cast %58 : vector<16xf32> to vector<1x16xf32>
    %cst_18 = arith.constant dense<0xFF800000> : vector<16xf32>
    %60 = vector.multi_reduction <maximumf>, %22, %cst_18 [0] : vector<16x16xf32> to vector<16xf32>
    %61 = vector.shape_cast %60 : vector<16xf32> to vector<1x16xf32>
    %cst_19 = arith.constant dense<0xFF800000> : vector<16xf32>
    %62 = vector.multi_reduction <maximumf>, %26, %cst_19 [0] : vector<16x16xf32> to vector<16xf32>
    %63 = vector.shape_cast %62 : vector<16xf32> to vector<1x16xf32>
    %64 = arith.mulf %63, %8 : vector<1x16xf32>
    %cst_20 = arith.constant dense<0xFF800000> : vector<16xf32>
    %65 = vector.multi_reduction <maximumf>, %30, %cst_20 [0] : vector<16x16xf32> to vector<16xf32>
    %66 = vector.shape_cast %65 : vector<16xf32> to vector<1x16xf32>
    %67 = arith.mulf %66, %8 : vector<1x16xf32>
    %68 = tpu.concatenate %59, %61, %64, %67, %32, %32, %32, %32 in 0 : vector<1x16xf32>, vector<1x16xf32>, vector<1x16xf32>, vector<1x16xf32>, vector<1x16xf32>, vector<1x16xf32>, vector<1x16xf32>, vector<1x16xf32> -> vector<8x16xf32>
    %c0_i32_21 = arith.constant 0 : i32
    %69 = arith.cmpi eq, %arg1, %c0_i32_21 : i32
    %70 = arith.extui %69 : i1 to i32
    %c0_i32_22 = arith.constant 0 : i32
    %71 = arith.cmpi ne, %70, %c0_i32_22 : i32
    scf.if %71 {
      %c0_33 = arith.constant 0 : index
      %c0_34 = arith.constant 0 : index
      %c0_35 = arith.constant 0 : index
      %85 = vector.load %arg4[%c0_33, %c0_34, %c0_35] : memref<1x16x16xf32, #tpu.memory_space<vmem>>, vector<1x8x16xf32>
      %86 = vector.shape_cast %85 : vector<1x8x16xf32> to vector<8x16xf32>
      %87 = vector.shape_cast %57 : vector<8x16xf32> to vector<1x8x16xf32>
      tpu.vector_store %arg4[%c0_33, %c0_34, %c0_35], %87 {strides = array<i32>} : memref<1x16x16xf32, #tpu.memory_space<vmem>>, vector<1x8x16xf32>,
      %c0_36 = arith.constant 0 : index
      %c8 = arith.constant 8 : index
      %c0_37 = arith.constant 0 : index
      %88 = vector.load %arg4[%c0_36, %c8, %c0_37] : memref<1x16x16xf32, #tpu.memory_space<vmem>>, vector<1x8x16xf32>
      %89 = vector.shape_cast %88 : vector<1x8x16xf32> to vector<8x16xf32>
      %90 = vector.shape_cast %68 : vector<8x16xf32> to vector<1x8x16xf32>
      tpu.vector_store %arg4[%c0_36, %c8, %c0_37], %90 {strides = array<i32>} : memref<1x16x16xf32, #tpu.memory_space<vmem>>, vector<1x8x16xf32>,
    } else {
    }
    %c0_i32_23 = arith.constant 0 : i32
    %72 = arith.cmpi sgt, %arg1, %c0_i32_23 : i32
    %73 = arith.extui %72 : i1 to i32
    %c0_i32_24 = arith.constant 0 : i32
    %74 = arith.cmpi ne, %73, %c0_i32_24 : i32
    scf.if %74 {
      %c0_33 = arith.constant 0 : index
      %c0_34 = arith.constant 0 : index
      %c0_35 = arith.constant 0 : index
      %85 = vector.load %arg4[%c0_33, %c0_34, %c0_35] : memref<1x16x16xf32, #tpu.memory_space<vmem>>, vector<1x8x16xf32>
      %86 = vector.shape_cast %85 : vector<1x8x16xf32> to vector<8x16xf32>
      %87 = arith.addf %86, %57 : vector<8x16xf32>
      %c0_36 = arith.constant 0 : index
      %c0_37 = arith.constant 0 : index
      %c0_38 = arith.constant 0 : index
      %88 = vector.load %arg4[%c0_36, %c0_37, %c0_38] : memref<1x16x16xf32, #tpu.memory_space<vmem>>, vector<1x8x16xf32>
      %89 = vector.shape_cast %88 : vector<1x8x16xf32> to vector<8x16xf32>
      %90 = vector.shape_cast %87 : vector<8x16xf32> to vector<1x8x16xf32>
      tpu.vector_store %arg4[%c0_36, %c0_37, %c0_38], %90 {strides = array<i32>} : memref<1x16x16xf32, #tpu.memory_space<vmem>>, vector<1x8x16xf32>,
      %c0_39 = arith.constant 0 : index
      %c8 = arith.constant 8 : index
      %c0_40 = arith.constant 0 : index
      %91 = vector.load %arg4[%c0_39, %c8, %c0_40] : memref<1x16x16xf32, #tpu.memory_space<vmem>>, vector<1x8x16xf32>
      %92 = vector.shape_cast %91 : vector<1x8x16xf32> to vector<8x16xf32>
      %93 = arith.maximumf %92, %68 : vector<8x16xf32>
      %c0_41 = arith.constant 0 : index
      %c8_42 = arith.constant 8 : index
      %c0_43 = arith.constant 0 : index
      %94 = vector.load %arg4[%c0_41, %c8_42, %c0_43] : memref<1x16x16xf32, #tpu.memory_space<vmem>>, vector<1x8x16xf32>
      %95 = vector.shape_cast %94 : vector<1x8x16xf32> to vector<8x16xf32>
      %96 = vector.shape_cast %93 : vector<8x16xf32> to vector<1x8x16xf32>
      tpu.vector_store %arg4[%c0_41, %c8_42, %c0_43], %96 {strides = array<i32>} : memref<1x16x16xf32, #tpu.memory_space<vmem>>, vector<1x8x16xf32>,
    } else {
    }
    %c0_i32_25 = arith.constant 0 : i32
    %75 = arith.cmpi eq, %arg1, %c0_i32_25 : i32
    %76 = arith.extui %75 : i1 to i32
    %c0_i32_26 = arith.constant 0 : i32
    %77 = arith.cmpi ne, %76, %c0_i32_26 : i32
    scf.if %77 {
      %85 = vector.extract_strided_slice %18 {offsets = [0, 0], sizes = [1, 16], strides = [1, 1]} : vector<16x16xf32> to vector<1x16xf32>
      %86 = vector.extract_strided_slice %22 {offsets = [0, 0], sizes = [1, 16], strides = [1, 1]} : vector<16x16xf32> to vector<1x16xf32>
      %c0_33 = arith.constant 0 : index
      %c0_34 = arith.constant 0 : index
      %c0_35 = arith.constant 0 : index
      %87 = vector.load %arg4[%c0_33, %c0_34, %c0_35] : memref<1x16x16xf32, #tpu.memory_space<vmem>>, vector<1x1x16xf32>
      %88 = vector.shape_cast %87 : vector<1x1x16xf32> to vector<1x16xf32>
      %89 = arith.mulf %85, %85 : vector<1x16xf32>
      %90 = arith.subf %88, %89 : vector<1x16xf32>
      %c0_36 = arith.constant 0 : index
      %c0_37 = arith.constant 0 : index
      %c0_38 = arith.constant 0 : index
      %91 = vector.load %arg4[%c0_36, %c0_37, %c0_38] : memref<1x16x16xf32, #tpu.memory_space<vmem>>, vector<1x1x16xf32>
      %92 = vector.shape_cast %91 : vector<1x1x16xf32> to vector<1x16xf32>
      %93 = vector.shape_cast %90 : vector<1x16xf32> to vector<1x1x16xf32>
      tpu.vector_store %arg4[%c0_36, %c0_37, %c0_38], %93 {strides = array<i32>} : memref<1x16x16xf32, #tpu.memory_space<vmem>>, vector<1x1x16xf32>,
      %c0_39 = arith.constant 0 : index
      %c1_40 = arith.constant 1 : index
      %c0_41 = arith.constant 0 : index
      %94 = vector.load %arg4[%c0_39, %c1_40, %c0_41] : memref<1x16x16xf32, #tpu.memory_space<vmem>>, vector<1x1x16xf32>
      %95 = vector.shape_cast %94 : vector<1x1x16xf32> to vector<1x16xf32>
      %96 = arith.mulf %86, %86 : vector<1x16xf32>
      %97 = arith.subf %95, %96 : vector<1x16xf32>
      %c0_42 = arith.constant 0 : index
      %c1_43 = arith.constant 1 : index
      %c0_44 = arith.constant 0 : index
      %98 = vector.load %arg4[%c0_42, %c1_43, %c0_44] : memref<1x16x16xf32, #tpu.memory_space<vmem>>, vector<1x1x16xf32>
      %99 = vector.shape_cast %98 : vector<1x1x16xf32> to vector<1x16xf32>
      %100 = vector.shape_cast %97 : vector<1x16xf32> to vector<1x1x16xf32>
      tpu.vector_store %arg4[%c0_42, %c1_43, %c0_44], %100 {strides = array<i32>} : memref<1x16x16xf32, #tpu.memory_space<vmem>>, vector<1x1x16xf32>,
      %c0_45 = arith.constant 0 : index
      %c2 = arith.constant 2 : index
      %c0_46 = arith.constant 0 : index
      %101 = vector.load %arg4[%c0_45, %c2, %c0_46] : memref<1x16x16xf32, #tpu.memory_space<vmem>>, vector<1x1x16xf32>
      %102 = vector.shape_cast %101 : vector<1x1x16xf32> to vector<1x16xf32>
      %103 = arith.mulf %85, %86 : vector<1x16xf32>
      %104 = arith.subf %102, %103 : vector<1x16xf32>
      %c0_47 = arith.constant 0 : index
      %c2_48 = arith.constant 2 : index
      %c0_49 = arith.constant 0 : index
      %105 = vector.load %arg4[%c0_47, %c2_48, %c0_49] : memref<1x16x16xf32, #tpu.memory_space<vmem>>, vector<1x1x16xf32>
      %106 = vector.shape_cast %105 : vector<1x1x16xf32> to vector<1x16xf32>
      %107 = vector.shape_cast %104 : vector<1x16xf32> to vector<1x1x16xf32>
      tpu.vector_store %arg4[%c0_47, %c2_48, %c0_49], %107 {strides = array<i32>} : memref<1x16x16xf32, #tpu.memory_space<vmem>>, vector<1x1x16xf32>,
      %108 = tpu.iota {dimensions = array<i32: 0>} : vector<16x16xi32>
      %c1_i32_50 = arith.constant 1 : i32
      %109 = vector.broadcast %c1_i32_50 : i32 to vector<16x16xi32>
      %110 = arith.cmpi sge, %108, %109 : vector<16x16xi32>
      %cst_51 = arith.constant 0.000000e+00 : f32
      %111 = vector.broadcast %cst_51 : f32 to vector<16x16xf32>
      %112 = arith.select %110, %18, %111 : vector<16x16xi1>, vector<16x16xf32>
      %cst_52 = arith.constant dense<0xFF800000> : vector<16xf32>
      %113 = vector.multi_reduction <maximumf>, %112, %cst_52 [0] : vector<16x16xf32> to vector<16xf32>
      %114 = vector.shape_cast %113 : vector<16xf32> to vector<1x16xf32>
      %c0_53 = arith.constant 0 : index
      %c8 = arith.constant 8 : index
      %c0_54 = arith.constant 0 : index
      %115 = vector.load %arg4[%c0_53, %c8, %c0_54] : memref<1x16x16xf32, #tpu.memory_space<vmem>>, vector<1x1x16xf32>
      %116 = vector.shape_cast %115 : vector<1x1x16xf32> to vector<1x16xf32>
      %117 = vector.shape_cast %114 : vector<1x16xf32> to vector<1x1x16xf32>
      tpu.vector_store %arg4[%c0_53, %c8, %c0_54], %117 {strides = array<i32>} : memref<1x16x16xf32, #tpu.memory_space<vmem>>, vector<1x1x16xf32>,
      %cst_55 = arith.constant 0.000000e+00 : f32
      %118 = vector.broadcast %cst_55 : f32 to vector<16x16xf32>
      %119 = arith.select %110, %22, %118 : vector<16x16xi1>, vector<16x16xf32>
      %cst_56 = arith.constant dense<0xFF800000> : vector<16xf32>
      %120 = vector.multi_reduction <maximumf>, %119, %cst_56 [0] : vector<16x16xf32> to vector<16xf32>
      %121 = vector.shape_cast %120 : vector<16xf32> to vector<1x16xf32>
      %c0_57 = arith.constant 0 : index
      %c9 = arith.constant 9 : index
      %c0_58 = arith.constant 0 : index
      %122 = vector.load %arg4[%c0_57, %c9, %c0_58] : memref<1x16x16xf32, #tpu.memory_space<vmem>>, vector<1x1x16xf32>
      %123 = vector.shape_cast %122 : vector<1x1x16xf32> to vector<1x16xf32>
      %124 = vector.shape_cast %121 : vector<1x16xf32> to vector<1x1x16xf32>
      tpu.vector_store %arg4[%c0_57, %c9, %c0_58], %124 {strides = array<i32>} : memref<1x16x16xf32, #tpu.memory_space<vmem>>, vector<1x1x16xf32>,
    } else {
    }
    %c0_i32_27 = arith.constant 0 : i32
    %78 = arith.cmpi eq, %arg1, %c0_i32_27 : i32
    %79 = arith.extui %78 : i1 to i32
    %c0_i32_28 = arith.constant 0 : i32
    %80 = arith.cmpi ne, %79, %c0_i32_28 : i32
    scf.if %80 {
      %85 = vector.extract_strided_slice %1 {offsets = [15, 0], sizes = [1, 16], strides = [1, 1]} : vector<16x16xf32> to vector<1x16xf32>
      %86 = math.absf %85 : vector<1x16xf32>
      %87 = arith.mulf %86, %8 : vector<1x16xf32>
      %88 = vector.extract_strided_slice %3 {offsets = [15, 0], sizes = [1, 16], strides = [1, 1]} : vector<16x16xf32> to vector<1x16xf32>
      %89 = math.absf %88 : vector<1x16xf32>
      %90 = arith.mulf %89, %8 : vector<1x16xf32>
      %c0_33 = arith.constant 0 : index
      %c3 = arith.constant 3 : index
      %c0_34 = arith.constant 0 : index
      %91 = vector.load %arg4[%c0_33, %c3, %c0_34] : memref<1x16x16xf32, #tpu.memory_space<vmem>>, vector<1x1x16xf32>
      %92 = vector.shape_cast %91 : vector<1x1x16xf32> to vector<1x16xf32>
      %93 = arith.mulf %87, %87 : vector<1x16xf32>
      %94 = arith.addf %92, %93 : vector<1x16xf32>
      %c0_35 = arith.constant 0 : index
      %c3_36 = arith.constant 3 : index
      %c0_37 = arith.constant 0 : index
      %95 = vector.load %arg4[%c0_35, %c3_36, %c0_37] : memref<1x16x16xf32, #tpu.memory_space<vmem>>, vector<1x1x16xf32>
      %96 = vector.shape_cast %95 : vector<1x1x16xf32> to vector<1x16xf32>
      %97 = vector.shape_cast %94 : vector<1x16xf32> to vector<1x1x16xf32>
      tpu.vector_store %arg4[%c0_35, %c3_36, %c0_37], %97 {strides = array<i32>} : memref<1x16x16xf32, #tpu.memory_space<vmem>>, vector<1x1x16xf32>,
      %c0_38 = arith.constant 0 : index
      %c4 = arith.constant 4 : index
      %c0_39 = arith.constant 0 : index
      %98 = vector.load %arg4[%c0_38, %c4, %c0_39] : memref<1x16x16xf32, #tpu.memory_space<vmem>>, vector<1x1x16xf32>
      %99 = vector.shape_cast %98 : vector<1x1x16xf32> to vector<1x16xf32>
      %100 = arith.mulf %90, %90 : vector<1x16xf32>
      %101 = arith.addf %99, %100 : vector<1x16xf32>
      %c0_40 = arith.constant 0 : index
      %c4_41 = arith.constant 4 : index
      %c0_42 = arith.constant 0 : index
      %102 = vector.load %arg4[%c0_40, %c4_41, %c0_42] : memref<1x16x16xf32, #tpu.memory_space<vmem>>, vector<1x1x16xf32>
      %103 = vector.shape_cast %102 : vector<1x1x16xf32> to vector<1x16xf32>
      %104 = vector.shape_cast %101 : vector<1x16xf32> to vector<1x1x16xf32>
      tpu.vector_store %arg4[%c0_40, %c4_41, %c0_42], %104 {strides = array<i32>} : memref<1x16x16xf32, #tpu.memory_space<vmem>>, vector<1x1x16xf32>,
      %c0_43 = arith.constant 0 : index
      %c5 = arith.constant 5 : index
      %c0_44 = arith.constant 0 : index
      %105 = vector.load %arg4[%c0_43, %c5, %c0_44] : memref<1x16x16xf32, #tpu.memory_space<vmem>>, vector<1x1x16xf32>
      %106 = vector.shape_cast %105 : vector<1x1x16xf32> to vector<1x16xf32>
      %107 = arith.mulf %87, %90 : vector<1x16xf32>
      %108 = arith.addf %106, %107 : vector<1x16xf32>
      %c0_45 = arith.constant 0 : index
      %c5_46 = arith.constant 5 : index
      %c0_47 = arith.constant 0 : index
      %109 = vector.load %arg4[%c0_45, %c5_46, %c0_47] : memref<1x16x16xf32, #tpu.memory_space<vmem>>, vector<1x1x16xf32>
      %110 = vector.shape_cast %109 : vector<1x1x16xf32> to vector<1x16xf32>
      %111 = vector.shape_cast %108 : vector<1x16xf32> to vector<1x1x16xf32>
      tpu.vector_store %arg4[%c0_45, %c5_46, %c0_47], %111 {strides = array<i32>} : memref<1x16x16xf32, #tpu.memory_space<vmem>>, vector<1x1x16xf32>,
      %c0_48 = arith.constant 0 : index
      %c10 = arith.constant 10 : index
      %c0_49 = arith.constant 0 : index
      %112 = vector.load %arg4[%c0_48, %c10, %c0_49] : memref<1x16x16xf32, #tpu.memory_space<vmem>>, vector<1x1x16xf32>
      %113 = vector.shape_cast %112 : vector<1x1x16xf32> to vector<1x16xf32>
      %114 = arith.maximumf %113, %87 : vector<1x16xf32>
      %c0_50 = arith.constant 0 : index
      %c10_51 = arith.constant 10 : index
      %c0_52 = arith.constant 0 : index
      %115 = vector.load %arg4[%c0_50, %c10_51, %c0_52] : memref<1x16x16xf32, #tpu.memory_space<vmem>>, vector<1x1x16xf32>
      %116 = vector.shape_cast %115 : vector<1x1x16xf32> to vector<1x16xf32>
      %117 = vector.shape_cast %114 : vector<1x16xf32> to vector<1x1x16xf32>
      tpu.vector_store %arg4[%c0_50, %c10_51, %c0_52], %117 {strides = array<i32>} : memref<1x16x16xf32, #tpu.memory_space<vmem>>, vector<1x1x16xf32>,
      %c0_53 = arith.constant 0 : index
      %c11 = arith.constant 11 : index
      %c0_54 = arith.constant 0 : index
      %118 = vector.load %arg4[%c0_53, %c11, %c0_54] : memref<1x16x16xf32, #tpu.memory_space<vmem>>, vector<1x1x16xf32>
      %119 = vector.shape_cast %118 : vector<1x1x16xf32> to vector<1x16xf32>
      %120 = arith.maximumf %119, %90 : vector<1x16xf32>
      %c0_55 = arith.constant 0 : index
      %c11_56 = arith.constant 11 : index
      %c0_57 = arith.constant 0 : index
      %121 = vector.load %arg4[%c0_55, %c11_56, %c0_57] : memref<1x16x16xf32, #tpu.memory_space<vmem>>, vector<1x1x16xf32>
      %122 = vector.shape_cast %121 : vector<1x1x16xf32> to vector<1x16xf32>
      %123 = vector.shape_cast %120 : vector<1x16xf32> to vector<1x1x16xf32>
      tpu.vector_store %arg4[%c0_55, %c11_56, %c0_57], %123 {strides = array<i32>} : memref<1x16x16xf32, #tpu.memory_space<vmem>>, vector<1x1x16xf32>,
    } else {
    }
    %81 = vector.extract_strided_slice %1 {offsets = [15, 0], sizes = [1, 16], strides = [1, 1]} : vector<16x16xf32> to vector<1x16xf32>
    %c0_29 = arith.constant 0 : index
    %c0_30 = arith.constant 0 : index
    %82 = vector.load %arg5[%c0_29, %c0_30] : memref<2x16xf32, #tpu.memory_space<vmem>>, vector<1x16xf32>
    tpu.vector_store %arg5[%c0_29, %c0_30], %81 {strides = array<i32>} : memref<2x16xf32, #tpu.memory_space<vmem>>, vector<1x16xf32>,
    %83 = vector.extract_strided_slice %3 {offsets = [15, 0], sizes = [1, 16], strides = [1, 1]} : vector<16x16xf32> to vector<1x16xf32>
    %c1_31 = arith.constant 1 : index
    %c0_32 = arith.constant 0 : index
    %84 = vector.load %arg5[%c1_31, %c0_32] : memref<2x16xf32, #tpu.memory_space<vmem>>, vector<1x16xf32>
    tpu.vector_store %arg5[%c1_31, %c0_32], %83 {strides = array<i32>} : memref<2x16xf32, #tpu.memory_space<vmem>>, vector<1x16xf32>,
    return
  }
  func.func @transform_0(%arg0: i32, %arg1: i32) -> (i32, i32, i32) {
    %c0_i32 = arith.constant 0 : i32
    %c0_i32_0 = arith.constant 0 : i32
    return %arg0, %arg1, %c0_i32 : i32, i32, i32
  }
  func.func @transform_1(%arg0: i32, %arg1: i32) -> (i32, i32, i32) {
    %c0_i32 = arith.constant 0 : i32
    %c0_i32_0 = arith.constant 0 : i32
    return %arg0, %arg1, %c0_i32 : i32, i32, i32
  }
  func.func @transform_2(%arg0: i32, %arg1: i32) -> (i32, i32, i32) {
    %c0_i32 = arith.constant 0 : i32
    %c0_i32_0 = arith.constant 0 : i32
    %c0_i32_1 = arith.constant 0 : i32
    return %arg0, %c0_i32, %c0_i32_0 : i32, i32, i32
  }
}

</mosaic_0001>

<llo_original>
// kernel: tpu_custom_call.1
$region0: #{tpu_custom_call.1}
  #allocation0 [shape = 'u32[]', space=smem, size = 0x4, offset = 0x4, fixed_abs, tag = 'smem constant byte address 0x4 - core index']
  #allocation1 [shape = 'u32[72,128]{1,0:T(1,128)}', space=vmem, size = 0x9000, scoped, tag = 'internal scratch']
  #allocation2 [shape = 'f32[2,16]{1,0:T(2,128)}', space=vmem, size = 0x400, scoped, tag = 'scratch operand']
  %s0 = inlined_call_operand.hbm [shape: f32[2,16,16], index: 0, kind: input, shape index: {}]
  %s1 = inlined_call_operand.hbm [shape: f32[2,16,16], index: 1, kind: input, shape index: {}]
  %s2 = inlined_call_operand.hbm [shape: f32[2,16,16], index: 2, kind: output, shape index: {}]
  %s3 = sld [smem:[#allocation0]]
  $region65: #{tpu_custom_call.1} parent=0
    _
  %s5 = ssub.s32 1, %s3
  %s6 = scalar_select 0, %s5, %s3
  $region1: #{tpu_custom_call.1} parent=0
    #allocation3 [shape = 'u8[16384]{0}', space=vmem, size = 0x4000, scoped, tag = 'input window, operand 0']
    #allocation4 [shape = 's32[2]{0}', space=sflag, size = 0x8, scoped, tag = 'scoped memory for tpu_custom_call.1']
    #allocation5 [shape = 's32[2]{0}', space=sflag, size = 0x8, scoped, tag = 'scoped memory for tpu_custom_call.1']
    #allocation6 [shape = 'u8[16384]{0}', space=vmem, size = 0x4000, scoped, tag = 'input window, operand 1']
    #allocation7 [shape = 's32[2]{0}', space=sflag, size = 0x8, scoped, tag = 'scoped memory for tpu_custom_call.1']
    #allocation8 [shape = 'u8[16384]{0}', space=vmem, size = 0x4000, scoped, tag = 'output window, operand 0']
    %7 = vsyncpa [#allocation4], 0
    %s8 = scalar_lea.sflag [#allocation4], 1
    %9 = vsyncpa %s8, 0
    %10 = vsyncpa [#allocation7], 0
    %s11 = scalar_lea.sflag [#allocation7], 1
    %12 = vsyncpa %s11, 0
    %13 = vsyncpa [#allocation5], 0
    %s14 = scalar_lea.sflag [#allocation5], 1
    %15 = vsyncpa %s14, 0
    loop: start=0, step=1, limit=4
    $region2: #{tpu_custom_call.1} parent=1 // loop_pre_header
      _
    $region3: #{tpu_custom_call.1} parent=1 // loop_header
      %s17 = sphi 0, %s21
      %p18 = scmp.ge.s32.totalorder %s17, 4
      %s24 = sphi 0, %s36
      %s25 = sphi 0, %s32
      %s26 = sphi 0, %s24
      %s27 = sphi 0, %s25
      %s28 = sphi 0, %s26
      %s29 = sphi 0, %s27
      %s41 = sphi 0, %s43
      %s44 = sphi 0, %s41
      %s45 = sphi 0, %s44
      %s61 = sphi 0, %s45
      %s69 = sphi 0, %s71
      %s72 = sphi 0, %s69
      %s73 = sphi 0, %s72
      %s89 = sphi 0, %s73
      %s95 = sphi 0, %s97
      %s98 = sphi 0, %s95
      %s99 = sphi 0, %s98
      %s115 = sphi 0, %s99
    $region4: #{tpu_custom_call.1} parent=1 // loop_header_branch
      %20 = sbr.rel (%p18) target = $region8
    $region5: #{tpu_custom_call.1} parent=1 // loop_body
      %s22 = ssub.s32 %s17, 1
      %s23 = ssub.s32 %s17, 2
      %s30 = sadd.s32 1, %s25
      %p31 = scmp.ge.s32.totalorder %s30, 1
      %s32 = scalar_select %p31, 0, %s30
      %s33 = sadd.s32 1, %s24
      %s34 = scalar_select %p31, %s33, %s24
      %p35 = scmp.ge.s32.totalorder %s34, 2
      %s36 = scalar_select %p35, 0, %s34
      %s37 = ssub.s32 %s24, %s36
      %s38 = ssub.s32 %s25, %s32
      %s39 = sor.u32 %s37, %s38
      %p40 = scmp.eq.s32.totalorder %s39, 0
      %s42 = sadd.s32 %s41, 1
      %s43 = scalar_select %p40, %s41, %s42
      %p46 = pneg %p40
      %p47 = scmp.eq.s32.totalorder %s17, 1
      %p48 = por %p46, %p47
      %p49 = scmp.ne.s32.totalorder %s41, %s44
      %p50 = scmp.eq.s32.totalorder %s17, 0
      %p51 = por %p49, %p50
      %p52 = scmp.ne.s32.totalorder %s41, %s44
      %p53 = scmp.eq.s32.totalorder %s22, 1
      %p54 = por %p52, %p53
      %p55 = scmp.ne.s32.totalorder %s44, %s45
      %p56 = scmp.eq.s32.totalorder %s22, 0
      %p57 = por %p55, %p56
      %p58 = scmp.ne.s32.totalorder %s44, %s45
      %p59 = scmp.eq.s32.totalorder %s23, 1
      %p60 = por %p58, %p59
      %p62 = scmp.ne.s32.totalorder %s45, %s61
      %p63 = scmp.eq.s32.totalorder %s23, 0
      %p64 = por %p62, %p63
      %s65 = ssub.s32 %s24, %s36
      %s66 = ssub.s32 %s25, %s32
      %s67 = sor.u32 %s65, %s66
      %p68 = scmp.eq.s32.totalorder %s67, 0
      %s70 = sadd.s32 %s69, 1
      %s71 = scalar_select %p68, %s69, %s70
      %p74 = pneg %p68
      %p75 = scmp.eq.s32.totalorder %s17, 1
      %p76 = por %p74, %p75
      %p77 = scmp.ne.s32.totalorder %s69, %s72
      %p78 = scmp.eq.s32.totalorder %s17, 0
      %p79 = por %p77, %p78
      %p80 = scmp.ne.s32.totalorder %s69, %s72
      %p81 = scmp.eq.s32.totalorder %s22, 1
      %p82 = por %p80, %p81
      %p83 = scmp.ne.s32.totalorder %s72, %s73
      %p84 = scmp.eq.s32.totalorder %s22, 0
      %p85 = por %p83, %p84
      %p86 = scmp.ne.s32.totalorder %s72, %s73
      %p87 = scmp.eq.s32.totalorder %s23, 1
      %p88 = por %p86, %p87
      %p90 = scmp.ne.s32.totalorder %s73, %s89
      %p91 = scmp.eq.s32.totalorder %s23, 0
      %p92 = por %p90, %p91
      %s93 = ssub.s32 %s24, %s36
      %p94 = scmp.eq.s32.totalorder %s93, 0
      %s96 = sadd.s32 %s95, 1
      %s97 = scalar_select %p94, %s95, %s96
      %p100 = pneg %p94
      %p101 = scmp.eq.s32.totalorder %s17, 1
      %p102 = por %p100, %p101
      %p103 = scmp.ne.s32.totalorder %s95, %s98
      %p104 = scmp.eq.s32.totalorder %s17, 0
      %p105 = por %p103, %p104
      %p106 = scmp.ne.s32.totalorder %s95, %s98
      %p107 = scmp.eq.s32.totalorder %s22, 1
      %p108 = por %p106, %p107
      %p109 = scmp.ne.s32.totalorder %s98, %s99
      %p110 = scmp.eq.s32.totalorder %s22, 0
      %p111 = por %p109, %p110
      %p112 = scmp.ne.s32.totalorder %s98, %s99
      %p113 = scmp.eq.s32.totalorder %s23, 1
      %p114 = por %p112, %p113
      %p116 = scmp.ne.s32.totalorder %s99, %s115
      %p117 = scmp.eq.s32.totalorder %s23, 0
      %p118 = por %p116, %p117
      %p119 = scmp.le.s32.totalorder 1, %s17
      %p120 = scmp.lt.s32.totalorder %s17, 3
      %p121 = pnand %p119, %p120
      %p122 = pneg %p121
      // Predicated region
      $region9: #{tpu_custom_call.1} parent=5 // pred_check
        _
      $region10: #{tpu_custom_call.1} parent=5 // pred_check_branch
        %124 = sbr.rel (%p121) target = $region12
      $region11: #{tpu_custom_call.1} parent=5 // pred_region
        %s125 = ssub.s32 %s17, 1
      $region12: #{tpu_custom_call.1} parent=5 // pred_fallthru
        _
      %p126 = scmp.lt.s32.totalorder %s17, 2
      // Predicated region
      $region13: #{tpu_custom_call.1} parent=5 // pred_check
        %p127 = pneg %p126
      $region14: #{tpu_custom_call.1} parent=5 // pred_check_branch
        %129 = sbr.rel (%p127) target = $region16
      $region15: #{tpu_custom_call.1} parent=5 // pred_region
        // Predicated region
        $region17: #{tpu_custom_call.1} parent=15 // pred_check
          %p130 = pneg %p51
        $region18: #{tpu_custom_call.1} parent=15 // pred_check_branch
          %132 = sbr.rel (%p130) target = $region20
        $region19: #{tpu_custom_call.1} parent=15 // pred_region
          %s133 = sand.u32 %s41, 1
          %s134 = scalar_lea.sflag [#allocation4], %s133
          %s135 = sand.u32 %s41, 1
          %s136 = smul.addr %s135, 16
          %s137 = scalar_lea.vmem [#allocation3], %s136
          %s138 = smul.u32 2, %s25
          %140 = vsyncadd %s134, 0
          %s141 = smul.addr %s24, 2
          %s142 = sadd.s32 %s138, %s141
          %s143 = smul.addr %s142, 8
          %s144 = scalar_lea.hbm %s0, %s143
          %s145 = sshll.u32 %s144, 4
          %s146 = int_to_ptr.hbm [resolvable:$true] %s145
          %s147 = sshll.u32 %s137, 4
          %s148 = int_to_ptr.vmem [resolvable:$true] %s147
          %153 = dma.hbm_to_vmem [thread:$0]  %s146, 256, %s148, %s134, 128, 128, 8
        $region20: #{tpu_custom_call.1} parent=15 // pred_fallthru
          _
        // Predicated region
        $region21: #{tpu_custom_call.1} parent=15 // pred_check
          %p154 = pneg %p79
        $region22: #{tpu_custom_call.1} parent=15 // pred_check_branch
          %156 = sbr.rel (%p154) target = $region24
        $region23: #{tpu_custom_call.1} parent=15 // pred_region
          %s157 = sand.u32 %s69, 1
          %s158 = scalar_lea.sflag [#allocation7], %s157
          %s159 = sand.u32 %s69, 1
          %s160 = smul.addr %s159, 16
          %s161 = scalar_lea.vmem [#allocation6], %s160
          %s162 = smul.u32 2, %s25
          %164 = vsyncadd %s158, 0
          %s165 = smul.addr %s24, 2
          %s166 = sadd.s32 %s162, %s165
          %s167 = smul.addr %s166, 8
          %s168 = scalar_lea.hbm %s1, %s167
          %s169 = sshll.u32 %s168, 4
          %s170 = int_to_ptr.hbm [resolvable:$true] %s169
          %s171 = sshll.u32 %s161, 4
          %s172 = int_to_ptr.vmem [resolvable:$true] %s171
          %177 = dma.hbm_to_vmem [thread:$0]  %s170, 256, %s172, %s158, 128, 128, 8
        $region24: #{tpu_custom_call.1} parent=15 // pred_fallthru
          _
      $region16: #{tpu_custom_call.1} parent=5 // pred_fallthru
        _
      %p178 = scmp.le.s32.totalorder 1, %s17
      %p179 = scmp.lt.s32.totalorder %s17, 3
      %p180 = pnand %p178, %p179
      %p181 = pneg %p180
      // Predicated region
      $region25: #{tpu_custom_call.1} parent=5 // pred_check
        _
      $region26: #{tpu_custom_call.1} parent=5 // pred_check_branch
        %183 = sbr.rel (%p180) target = $region28
      $region27: #{tpu_custom_call.1} parent=5 // pred_region
        %s184 = ssub.s32 %s17, 1
        %s185 = sand.u32 %s44, 1
        %s186 = scalar_lea.sflag [#allocation4], %s185
        %s187 = sand.u32 %s44, 1
        %s188 = smul.addr %s187, 16
        %s189 = scalar_lea.vmem [#allocation3], %s188
        // Predicated region
        $region29: #{tpu_custom_call.1} parent=27 // pred_check
          %p190 = pneg %p57
        $region30: #{tpu_custom_call.1} parent=27 // pred_check_branch
          %192 = sbr.rel (%p190) target = $region32
        $region31: #{tpu_custom_call.1} parent=27 // pred_region
          %194 = dma.done %s186, 256
        $region32: #{tpu_custom_call.1} parent=27 // pred_fallthru
          _
        %s195 = sand.u32 %s72, 1
        %s196 = scalar_lea.sflag [#allocation7], %s195
        %s197 = sand.u32 %s72, 1
        %s198 = smul.addr %s197, 16
        %s199 = scalar_lea.vmem [#allocation6], %s198
        // Predicated region
        $region33: #{tpu_custom_call.1} parent=27 // pred_check
          %p200 = pneg %p85
        $region34: #{tpu_custom_call.1} parent=27 // pred_check_branch
          %202 = sbr.rel (%p200) target = $region36
        $region35: #{tpu_custom_call.1} parent=27 // pred_region
          %204 = dma.done %s196, 256
        $region36: #{tpu_custom_call.1} parent=27 // pred_fallthru
          _
        %s205 = sand.u32 %s44, 1
        %s206 = scalar_lea.sflag [#allocation4], %s205
        %s207 = sand.u32 %s44, 1
        %s208 = smul.addr %s207, 16
        %s209 = scalar_lea.vmem [#allocation3], %s208
        %p210 = pneg %p57
        %p211 = pneg %p54
        %s212 = sand.u32 %s72, 1
        %s213 = scalar_lea.sflag [#allocation7], %s212
        %s214 = sand.u32 %s72, 1
        %s215 = smul.addr %s214, 16
        %s216 = scalar_lea.vmem [#allocation6], %s215
        %p217 = pneg %p85
        %p218 = pneg %p82
        %p219 = pneg %p111
        %p220 = pneg %p108
        %s221 = sand.u32 %s98, 1
        %s222 = scalar_lea.sflag [#allocation5], %s221
        %s223 = sand.u32 %s98, 1
        %s224 = smul.addr %s223, 16
        %s225 = scalar_lea.vmem [#allocation8], %s224
        %s226 = smul.u32 2, %s27
        %s227 = smul.u32 2, %s27
        %v228 = vld [vmem:[%s189] sm:$0xff]
        %v229 = vld [vmem:[%s189 + $0x8] sm:$0xff]
        %v230 = vld [vmem:[%s199] sm:$0xff]
        %v231 = vld [vmem:[%s199 + $0x8] sm:$0xff]
        %v232 = vlaneseq
        %v233 = vand.u32 %v232, 127
        %vm234 = vcmp.ge.s32.totalorder %v233, 1
        %v235 = vsel %vm234, 1, 0
        %v236 = vcvt.s32.f32 %v235
        %p237 = scmp.eq.s32.totalorder %s27, 0
        // Predicated region
        $region37: #{tpu_custom_call.1} parent=27 // pred_check
          %p238 = pneg %p237
        $region38: #{tpu_custom_call.1} parent=27 // pred_check_branch
          %240 = sbr.rel (%p238) target = $region40
        $region39: #{tpu_custom_call.1} parent=27 // pred_region
          %vm241 = vcmask 122880
          %242 = vst.msk [vmem:[#allocation2] sm:$0x1] %vm241, %v228
          %243 = vst.msk [vmem:[#allocation2 + $0x1] sm:$0x1] %vm241, %v230
        $region40: #{tpu_custom_call.1} parent=27 // pred_fallthru
          _
        %v244 = vld [vmem:[#allocation2] sm:$0x1]
        %v245 = vld [vmem:[#allocation2 + $0x1] sm:$0x1]
        %248 = vrot.lane.b32.xlu0 %v228, 127
        %v249 = vpop.permute.xlu0 %248
        %250 = vrot.lane.b32.xlu0 %v229, 127
        %v251 = vpop.permute.xlu0 %250
        %vm254 = vcmask 121856
        %v255 = vsel %vm254, %v249, 0.0
        %v256 = vsel %vm254, %v251, 0.0
        %v257 = vsub.f32 %v255, %v228
        %v258 = vsub.f32 %v256, %v229
        %v259 = vand.u32 2147483647, %v257
        %v260 = vand.u32 2147483647, %v258
        %263 = vrot.lane.b32.xlu0 %v230, 127
        %v264 = vpop.permute.xlu0 %263
        %265 = vrot.lane.b32.xlu0 %v231, 127
        %v266 = vpop.permute.xlu0 %265
        %v269 = vsel %vm254, %v264, 0.0
        %v270 = vsel %vm254, %v266, 0.0
        %v271 = vsub.f32 %v269, %v230
        %v272 = vsub.f32 %v270, %v231
        %v273 = vand.u32 2147483647, %v271
        %v274 = vand.u32 2147483647, %v272
        %vm275 = vcmask 1040384
        %v276 = vrot.slane %v228, 7
        %v277 = vrot.slane %v229, 7
        %v278 = vsel %vm275, %v276, %v277
        %v281 = vsel %vm275, %v244, %v276
        %v282 = vsub.f32 %v228, %v281
        %v283 = vsub.f32 %v229, %v278
        %v284 = vand.u32 2147483647, %v282
        %v285 = vand.u32 2147483647, %v283
        %v286 = vrot.slane %v230, 7
        %v287 = vrot.slane %v231, 7
        %v288 = vsel %vm275, %v286, %v287
        %v291 = vsel %vm275, %v245, %v286
        %v292 = vsub.f32 %v230, %v291
        %v293 = vsub.f32 %v231, %v288
        %v294 = vand.u32 2147483647, %v292
        %v295 = vand.u32 2147483647, %v293
        %v296 = vsub.f32 %v228, %v230
        %v297 = vsub.f32 %v229, %v231
        %v298 = vmul.f32 %v259, %v259
        %v299 = vmul.f32 %v260, %v260
        %vm300 = vcmask 130048
        %v301 = vsel %vm300, %v298, 0.0
        %v302 = vsel %vm300, %v299, 0.0
        %v303 = vadd.f32 %v301, %v302
        %v304 = vrot.slane %v303, 4
        %v305 = vadd.f32 %v303, %v304
        %v306 = vrot.slane %v305, 2
        %v307 = vadd.f32 %v305, %v306
        %v308 = vrot.slane %v307, 1
        %v309 = vadd.f32 %v307, %v308
        %v310 = vmul.f32 %v273, %v273
        %v311 = vmul.f32 %v274, %v274
        %v312 = vsel %vm300, %v310, 0.0
        %v313 = vsel %vm300, %v311, 0.0
        %v314 = vadd.f32 %v312, %v313
        %v315 = vrot.slane %v314, 4
        %v316 = vadd.f32 %v314, %v315
        %v317 = vrot.slane %v316, 2
        %v318 = vadd.f32 %v316, %v317
        %v319 = vrot.slane %v318, 1
        %v320 = vadd.f32 %v318, %v319
        %v321 = vmul.f32 %v259, %v273
        %v322 = vmul.f32 %v260, %v274
        %v323 = vsel %vm300, %v321, 0.0
        %v324 = vsel %vm300, %v322, 0.0
        %v325 = vadd.f32 %v323, %v324
        %v326 = vrot.slane %v325, 4
        %v327 = vadd.f32 %v325, %v326
        %v328 = vrot.slane %v327, 2
        %v329 = vadd.f32 %v327, %v328
        %v330 = vrot.slane %v329, 1
        %v331 = vadd.f32 %v329, %v330
        %v332 = vmul.f32 %v284, %v284
        %v333 = vmul.f32 %v285, %v285
        %v334 = vsel %vm300, %v332, 0.0
        %v335 = vsel %vm300, %v333, 0.0
        %v336 = vadd.f32 %v334, %v335
        %v337 = vrot.slane %v336, 4
        %v338 = vadd.f32 %v336, %v337
        %v339 = vrot.slane %v338, 2
        %v340 = vadd.f32 %v338, %v339
        %v341 = vrot.slane %v340, 1
        %v342 = vadd.f32 %v340, %v341
        %v343 = vmul.f32 %v342, %v236
        %v344 = vmul.f32 %v294, %v294
        %v345 = vmul.f32 %v295, %v295
        %v346 = vsel %vm300, %v344, 0.0
        %v347 = vsel %vm300, %v345, 0.0
        %v348 = vadd.f32 %v346, %v347
        %v349 = vrot.slane %v348, 4
        %v350 = vadd.f32 %v348, %v349
        %v351 = vrot.slane %v350, 2
        %v352 = vadd.f32 %v350, %v351
        %v353 = vrot.slane %v352, 1
        %v354 = vadd.f32 %v352, %v353
        %v355 = vmul.f32 %v354, %v236
        %v356 = vmul.f32 %v284, %v294
        %v357 = vmul.f32 %v285, %v295
        %v358 = vsel %vm300, %v356, 0.0
        %v359 = vsel %vm300, %v357, 0.0
        %v360 = vadd.f32 %v358, %v359
        %v361 = vrot.slane %v360, 4
        %v362 = vadd.f32 %v360, %v361
        %v363 = vrot.slane %v362, 2
        %v364 = vadd.f32 %v362, %v363
        %v365 = vrot.slane %v364, 1
        %v366 = vadd.f32 %v364, %v365
        %v367 = vmul.f32 %v366, %v236
        %v368 = vmul.f32 %v296, %v296
        %v369 = vmul.f32 %v297, %v297
        %v370 = vsel %vm300, %v368, 0.0
        %v371 = vsel %vm300, %v369, 0.0
        %v372 = vadd.f32 %v370, %v371
        %v373 = vrot.slane %v372, 4
        %v374 = vadd.f32 %v372, %v373
        %v375 = vrot.slane %v374, 2
        %v376 = vadd.f32 %v374, %v375
        %v377 = vrot.slane %v376, 1
        %v378 = vadd.f32 %v376, %v377
        %v379 = vsel %vm275, %v309, %v320
        %vm380 = vcmask 1041408
        %v381 = vsel %vm380, %v379, %v331
        %vm382 = vcmask 1042432
        %v383 = vsel %vm382, %v381, %v343
        %vm384 = vcmask 1043456
        %v385 = vsel %vm384, %v383, %v355
        %vm386 = vcmask 1044480
        %v387 = vsel %vm386, %v385, %v367
        %vm388 = vcmask 1045504
        %v389 = vsel %vm388, %v387, %v378
        %vm390 = vcmask 1046528
        %v391 = vsel %vm390, %v389, 0.0
        %v392 = vsel %vm300, %v259, -inf
        %v393 = vsel %vm300, %v260, -inf
        %v394 = vmax.f32 %v392, %v393
        %v395 = vrot.slane %v394, 4
        %v396 = vmax.f32 %v394, %v395
        %v397 = vrot.slane %v396, 2
        %v398 = vmax.f32 %v396, %v397
        %v399 = vrot.slane %v398, 1
        %v400 = vmax.f32 %v398, %v399
        %v401 = vsel %vm300, %v273, -inf
        %v402 = vsel %vm300, %v274, -inf
        %v403 = vmax.f32 %v401, %v402
        %v404 = vrot.slane %v403, 4
        %v405 = vmax.f32 %v403, %v404
        %v406 = vrot.slane %v405, 2
        %v407 = vmax.f32 %v405, %v406
        %v408 = vrot.slane %v407, 1
        %v409 = vmax.f32 %v407, %v408
        %v410 = vsel %vm300, %v284, -inf
        %v411 = vsel %vm300, %v285, -inf
        %v412 = vmax.f32 %v410, %v411
        %v413 = vrot.slane %v412, 4
        %v414 = vmax.f32 %v412, %v413
        %v415 = vrot.slane %v414, 2
        %v416 = vmax.f32 %v414, %v415
        %v417 = vrot.slane %v416, 1
        %v418 = vmax.f32 %v416, %v417
        %v419 = vmul.f32 %v418, %v236
        %v420 = vsel %vm300, %v294, -inf
        %v421 = vsel %vm300, %v295, -inf
        %v422 = vmax.f32 %v420, %v421
        %v423 = vrot.slane %v422, 4
        %v424 = vmax.f32 %v422, %v423
        %v425 = vrot.slane %v424, 2
        %v426 = vmax.f32 %v424, %v425
        %v427 = vrot.slane %v426, 1
        %v428 = vmax.f32 %v426, %v427
        %v429 = vmul.f32 %v428, %v236
        %v430 = vsel %vm275, %v400, %v409
        %v431 = vsel %vm380, %v430, %v419
        %v432 = vsel %vm382, %v431, %v429
        %v433 = vsel %vm384, %v432, 0.0
        %v434 = vsel %vm386, %v433, 0.0
        %v435 = vsel %vm388, %v434, 0.0
        %v436 = vsel %vm390, %v435, 0.0
        // Predicated region
        $region41: #{tpu_custom_call.1} parent=27 // pred_check
          %p437 = pneg %p237
        $region42: #{tpu_custom_call.1} parent=27 // pred_check_branch
          %439 = sbr.rel (%p437) target = $region44
        $region43: #{tpu_custom_call.1} parent=27 // pred_region
          %440 = vst.msk [vmem:[%s225] sm:$0xff] %vm300, %v391
          %441 = vst.msk [vmem:[%s225 + $0x8] sm:$0xff] %vm300, %v436
        $region44: #{tpu_custom_call.1} parent=27 // pred_fallthru
          _
        %p442 = scmp.gt.s32.totalorder %s27, 0
        // Predicated region
        $region45: #{tpu_custom_call.1} parent=27 // pred_check
          %p443 = pneg %p442
        $region46: #{tpu_custom_call.1} parent=27 // pred_check_branch
          %445 = sbr.rel (%p443) target = $region48
        $region47: #{tpu_custom_call.1} parent=27 // pred_region
          %v446 = vld [vmem:[%s225] sm:$0xff]
          %v447 = vadd.f32 %v446, %v391
          %448 = vst.msk [vmem:[%s225] sm:$0xff] %vm300, %v447
          %v449 = vld [vmem:[%s225 + $0x8] sm:$0xff]
          %v450 = vmax.f32 %v449, %v436
          %451 = vst.msk [vmem:[%s225 + $0x8] sm:$0xff] %vm300, %v450
        $region48: #{tpu_custom_call.1} parent=27 // pred_fallthru
          _
        // Predicated region
        $region49: #{tpu_custom_call.1} parent=27 // pred_check
          %p452 = pneg %p237
        $region50: #{tpu_custom_call.1} parent=27 // pred_check_branch
          %454 = sbr.rel (%p452) target = $region52
        $region51: #{tpu_custom_call.1} parent=27 // pred_region
          %v455 = vld [vmem:[%s225] sm:$0x1]
          %v456 = vsub.f32 %v455, %v298
          %vm457 = vcmask 122880
          %458 = vst.msk [vmem:[%s225] sm:$0x1] %vm457, %v456
          %v459 = vld [vmem:[%s225 + $0x1] sm:$0x1]
          %v460 = vsub.f32 %v459, %v310
          %461 = vst.msk [vmem:[%s225 + $0x1] sm:$0x1] %vm457, %v460
          %v462 = vld [vmem:[%s225 + $0x2] sm:$0x1]
          %v463 = vsub.f32 %v462, %v321
          %464 = vst.msk [vmem:[%s225 + $0x2] sm:$0x1] %vm457, %v463
          %v465 = vlaneseq
          %v466 = vshrl.u32 %v465, 7
          %v467 = vadd.s32 %v466, 8
          %vm468 = vcmp.ge.s32.totalorder %v466, 1
          %vm469 = vcmp.ge.s32.totalorder %v467, 1
          %v470 = vsel %vm468, %v259, 0.0
          %v471 = vsel %vm469, %v260, 0.0
          %v472 = vsel %vm300, %v470, -inf
          %v473 = vsel %vm300, %v471, -inf
          %v474 = vmax.f32 %v472, %v473
          %v475 = vrot.slane %v474, 4
          %v476 = vmax.f32 %v474, %v475
          %v477 = vrot.slane %v476, 2
          %v478 = vmax.f32 %v476, %v477
          %v479 = vrot.slane %v478, 1
          %v480 = vmax.f32 %v478, %v479
          %481 = vst.msk [vmem:[%s225 + $0x8] sm:$0x1] %vm457, %v480
          %v482 = vsel %vm468, %v273, 0.0
          %v483 = vsel %vm469, %v274, 0.0
          %v484 = vsel %vm300, %v482, -inf
          %v485 = vsel %vm300, %v483, -inf
          %v486 = vmax.f32 %v484, %v485
          %v487 = vrot.slane %v486, 4
          %v488 = vmax.f32 %v486, %v487
          %v489 = vrot.slane %v488, 2
          %v490 = vmax.f32 %v488, %v489
          %v491 = vrot.slane %v490, 1
          %v492 = vmax.f32 %v490, %v491
          %493 = vst.msk [vmem:[%s225 + $0x9] sm:$0x1] %vm457, %v492
          %v494 = vand.u32 2147483647, %v229
          %v495 = vmul.f32 %v494, %v236
          %v496 = vand.u32 2147483647, %v231
          %v497 = vmul.f32 %v496, %v236
          %v498 = vld [vmem:[%s225 + $0x3] sm:$0x1]
          %v499 = vmul.f32 %v495, %v495
          %v501 = vrot.slane %v499, 7
          %v503 = vadd.f32 %v498, %v501
          %504 = vst.msk [vmem:[%s225 + $0x3] sm:$0x1] %vm457, %v503
          %v505 = vld [vmem:[%s225 + $0x4] sm:$0x1]
          %v506 = vmul.f32 %v497, %v497
          %v508 = vrot.slane %v506, 7
          %v510 = vadd.f32 %v505, %v508
          %511 = vst.msk [vmem:[%s225 + $0x4] sm:$0x1] %vm457, %v510
          %v512 = vld [vmem:[%s225 + $0x5] sm:$0x1]
          %v513 = vmul.f32 %v495, %v497
          %v515 = vrot.slane %v513, 7
          %v517 = vadd.f32 %v512, %v515
          %518 = vst.msk [vmem:[%s225 + $0x5] sm:$0x1] %vm457, %v517
          %v519 = vld [vmem:[%s225 + $0xa] sm:$0x1]
          %v521 = vrot.slane %v495, 7
          %v523 = vmax.f32 %v519, %v521
          %524 = vst.msk [vmem:[%s225 + $0xa] sm:$0x1] %vm457, %v523
          %v525 = vld [vmem:[%s225 + $0xb] sm:$0x1]
          %v527 = vrot.slane %v497, 7
          %v529 = vmax.f32 %v525, %v527
          %530 = vst.msk [vmem:[%s225 + $0xb] sm:$0x1] %vm457, %v529
        $region52: #{tpu_custom_call.1} parent=27 // pred_fallthru
          _
        %vm531 = vcmask 130055
        %532 = vst.msk [vmem:[#allocation2 - $0x7] sm:$0x80] %vm531, %v229
        %533 = vst.msk [vmem:[#allocation2 - $0x6] sm:$0x80] %vm531, %v231
        %s534 = sand.u32 %s98, 1
        %s535 = scalar_lea.sflag [#allocation5], %s534
        %s536 = sand.u32 %s98, 1
        %s537 = smul.addr %s536, 16
        %s538 = scalar_lea.vmem [#allocation8], %s537
        // Predicated region
        $region53: #{tpu_custom_call.1} parent=27 // pred_check
          %p539 = pneg %p108
        $region54: #{tpu_custom_call.1} parent=27 // pred_check_branch
          %541 = sbr.rel (%p539) target = $region56
        $region55: #{tpu_custom_call.1} parent=27 // pred_region
          %543 = vsyncadd %s535, 0
          %s544 = smul.addr %s26, 2
          %s545 = smul.addr %s544, 8
          %s546 = scalar_lea.hbm %s2, %s545
          %s547 = sshll.u32 %s538, 4
          %s548 = int_to_ptr.vmem [resolvable:$true] %s547
          %s549 = sshll.u32 %s546, 4
          %s550 = int_to_ptr.hbm [resolvable:$true] %s549
          %555 = dma.vmem_to_hbm [thread:$0]  %s548, 256, %s550, %s535, 128, 128, 8
        $region56: #{tpu_custom_call.1} parent=27 // pred_fallthru
          _
      $region28: #{tpu_custom_call.1} parent=5 // pred_fallthru
        _
      %p556 = scmp.le.s32.totalorder 2, %s17
      // Predicated region
      $region57: #{tpu_custom_call.1} parent=5 // pred_check
        %p557 = pneg %p556
      $region58: #{tpu_custom_call.1} parent=5 // pred_check_branch
        %559 = sbr.rel (%p557) target = $region60
      $region59: #{tpu_custom_call.1} parent=5 // pred_region
        %s560 = ssub.s32 %s17, 2
        // Predicated region
        $region61: #{tpu_custom_call.1} parent=59 // pred_check
          %p561 = pneg %p114
        $region62: #{tpu_custom_call.1} parent=59 // pred_check_branch
          %563 = sbr.rel (%p561) target = $region64
        $region63: #{tpu_custom_call.1} parent=59 // pred_region
          %s564 = sand.u32 %s99, 1
          %s565 = scalar_lea.sflag [#allocation5], %s564
          %s566 = sand.u32 %s99, 1
          %s567 = smul.addr %s566, 16
          %s568 = scalar_lea.vmem [#allocation8], %s567
          %570 = dma.done %s565, 256
        $region64: #{tpu_custom_call.1} parent=59 // pred_fallthru
          _
      $region60: #{tpu_custom_call.1} parent=5 // pred_fallthru
        _
    $region6: #{tpu_custom_call.1} parent=1 // loop_footer
      %s21 = sadd.s32 1, %s17
    $region7: #{tpu_custom_call.1} parent=1 // loop_footer_branch
      %16 = sbr.rel target = $region3
    $region8: #{tpu_custom_call.1} parent=1 // loop_exit
      _
    %571 = vsyncpa [#allocation4], 1
    %s572 = scalar_lea.sflag [#allocation4], 1
    %573 = vsyncpa %s572, 1
    %574 = vsyncpa [#allocation7], 1
    %s575 = scalar_lea.sflag [#allocation7], 1
    %576 = vsyncpa %s575, 1
    %577 = vsyncpa [#allocation5], 1
    %s578 = scalar_lea.sflag [#allocation5], 1
    %579 = vsyncpa %s578, 1

</llo_original>
